<compile_context>
chip_gen: v7x
topology: tpu7x:2x2x1
jax: 0.10.0
libtpu: 0.0.40
codegen_flags: <defaults>
</compile_context>

<pallas_src>
import functools

import jax
import jax.numpy as jnp
from jax.experimental import pallas as pl
from jax.experimental.pallas import tpu as pltpu


def _round_up(x, m):
    return ((x + m - 1) // m) * m


def _focal_partial_kernel(logits_ref, targets_ref, out_ref, *,
                          n_total, tile_n, num_tiles, mask_last):
    """Per-tile partial sum of the per-sample cross entropy.

    logits_ref : (TILE_N, C)   input dtype (f32/bf16)
    targets_ref: (TILE_N, 1)   int32 class indices
    out_ref    : (1, 1, 128)   f32 partial sum broadcast across the lane block
    """
    x = logits_ref[...]                                       # (TILE_N, C) input dtype
    tgt = targets_ref[...]                                    # (TILE_N, 1) int32
    tn, c = x.shape

    # Per-sample cross entropy on shifted logits (row_max cancels in nll).
    # max is exact in bf16; the f32 cast is folded into the subtraction so no
    # standalone full-tile f32 copy of the logits is materialized.
    row_max = jnp.max(x, axis=-1, keepdims=True)              # (TILE_N, 1) input dtype
    shifted = x.astype(jnp.float32) - row_max.astype(jnp.float32)  # (TILE_N, C) f32
    lse = jnp.log(jnp.sum(jnp.exp(shifted), axis=-1, keepdims=True))  # (TILE_N, 1)

    # Target-logit gather as a single masked-select reduce (no one-hot temp).
    col_ids = jax.lax.broadcasted_iota(jnp.int32, (tn, c), 1)
    tgt_shifted = jnp.sum(jnp.where(col_ids == tgt, shifted, 0.0),
                          axis=-1, keepdims=True)             # (TILE_N, 1)

    nll = lse - tgt_shifted                                   # (TILE_N, 1) f32

    def _store(total):
        out_ref[...] = jnp.broadcast_to(total.astype(jnp.float32), out_ref.shape)

    if mask_last:
        i = pl.program_id(0)
        is_last = i == num_tiles - 1

        @pl.when(is_last)
        def _():
            # Mask padded/garbage rows of the remainder tile (applied to nll,
            # post-lse: jnp.where does not propagate NaN/inf from the
            # unselected branch).
            row_ids = jax.lax.broadcasted_iota(jnp.int32, (tn, 1), 0) + i * tile_n
            _store(jnp.sum(jnp.where(row_ids < n_total, nll, 0.0)))

        @pl.when(jnp.logical_not(is_last))
        def _():
            _store(jnp.sum(nll))
    else:
        _store(jnp.sum(nll))


def focal_loss(inputs, targets, *, alpha=1.0, gamma=2.0, reduction="batchmean",
               max_tile_rows=None):
    """inputs: (N, C) logits (f32 or bf16); targets: (N,) or (N,1) int class ids."""
    targets = jnp.squeeze(targets)                 # mirror targets.squeeze()
    targets = targets.reshape(-1, 1).astype(jnp.int32)
    n, c = inputs.shape

    itemsize = jnp.dtype(inputs.dtype).itemsize
    align = 16 if itemsize == 2 else 8             # sublane packing
    c_pad = _round_up(c, 128)                      # lane padding in VMEM

    # --- generation-aware VMEM limit (v7x has 64 MiB/TC; v5e/v6e have 128) ---
    try:
        vmem_cap = int(pltpu.get_tpu_info().vmem_capacity_bytes)
    except Exception:
        vmem_cap = 0                               # unknown -> conservative
    if vmem_cap > 64 * 1024 * 1024:
        vmem_limit = 64 * 1024 * 1024              # v5e / v6e: big tiles
    else:
        vmem_limit = 36 * 1024 * 1024              # v7x / unknown: stay safe

    # --- tile_n from the true lane-padded working set ---
    # 2x double-buffered input (itemsize) + ~4 f32 full-tile intermediates
    # (shifted, exp, masked-select, slack), all padded to 128 lanes.
    bytes_per_row = c_pad * (2 * itemsize + 4 * 4)
    budget = int(vmem_limit * 0.75)                # ~25% headroom
    tile_n = max(align, budget // max(bytes_per_row, 1))

    n_pad = _round_up(n, align)
    tile_n = min(tile_n, n_pad)
    if max_tile_rows is not None:
        tile_n = min(tile_n, max(align, int(max_tile_rows)))
    tile_n = max(align, (tile_n // align) * align)

    # v7x megacore: ensure >= 2 balanced grid steps when the batch allows it,
    # so the 'parallel' axis actually shards across both TensorCores.
    if n > align and tile_n >= n:
        tile_n = max(align, _round_up(pl.cdiv(n, 2), align))

    num_tiles = pl.cdiv(n, tile_n)
    mask_last = (n % tile_n) != 0

    kernel = functools.partial(_focal_partial_kernel, n_total=n, tile_n=tile_n,
                               num_tiles=num_tiles, mask_last=mask_last)

    partials = pl.pallas_call(
        kernel,
        out_shape=jax.ShapeDtypeStruct((num_tiles, 1, 128), jnp.float32),
        grid=(num_tiles,),
        in_specs=[
            pl.BlockSpec((tile_n, c), lambda i: (i, 0)),
            pl.BlockSpec((tile_n, 1), lambda i: (i, 0)),
        ],
        out_specs=pl.BlockSpec((1, 1, 128), lambda i: (i, 0, 0)),
        compiler_params=pltpu.CompilerParams(
            dimension_semantics=("parallel",),     # megacore on v7x; harmless elsewhere
            vmem_limit_bytes=vmem_limit,
        ),
    )(inputs, targets)

    # --- tiny scalar finalize (mean + focal transform) in the wrapper ---
    bce = jnp.sum(partials[:, 0, 0]) / jnp.float32(n)
    pt = jnp.minimum(jnp.exp(-bce), 1.0)           # CE >= 0, guard pt > 1 noise
    one_minus_pt = 1.0 - pt
    g = float(gamma)
    if g.is_integer() and g >= 0:
        focal_factor = one_minus_pt ** int(g)      # lax.integer_pow (no NaN from tiny neg base)
    else:
        focal_factor = one_minus_pt ** g
    f_loss = jnp.float32(alpha) * focal_factor * bce

    # BCE is already a mean -> F_loss is a scalar; 'batchmean'/'sum'/None of a
    # scalar all return the same value (matches torch.mean/torch.sum of a 0-d).
    return f_loss


def _ref_focal(logits, targets, alpha, gamma):
    t = targets.reshape(-1, 1)
    logp = jax.nn.log_softmax(logits.astype(jnp.float32), axis=-1)
    bce = -jnp.mean(jnp.take_along_axis(logp, t, axis=-1))
    pt = jnp.exp(-bce)
    return alpha * (1.0 - pt) ** gamma * bce


if __name__ == "__main__":
    key = jax.random.PRNGKey(0)
    k1, k2, k3, k4 = jax.random.split(key, 4)

    # Small shape consistent with the module: (N, C) logits + integer targets.
    N, C = 8, 16
    logits = jax.random.normal(k1, (N, C), dtype=jnp.float32)
    targets = jax.random.randint(k2, (N, 1), 0, C, dtype=jnp.int32)

    loss = focal_loss(logits, targets, alpha=1, gamma=2, reduction="batchmean")
    jax.block_until_ready(loss)
    ref = _ref_focal(logits, targets, 1.0, 2.0)
    assert jnp.allclose(loss, ref, rtol=1e-5, atol=1e-5), (loss, ref)

    # Second check: multi-tile grid with a masked remainder tile.
    N2, C2 = 300, 64
    logits2 = jax.random.normal(k3, (N2, C2), dtype=jnp.float32)
    targets2 = jax.random.randint(k4, (N2,), 0, C2, dtype=jnp.int32)
    loss2 = focal_loss(logits2, targets2, alpha=1, gamma=2, max_tile_rows=64)
    jax.block_until_ready(loss2)
    ref2 = _ref_focal(logits2, targets2, 1.0, 2.0)
    assert jnp.allclose(loss2, ref2, rtol=1e-5, atol=1e-5), (loss2, ref2)

    # Third check: automatic tile sizing (no max_tile_rows), even divide.
    N3, C3 = 256, 32
    logits3 = jax.random.normal(k1, (N3, C3), dtype=jnp.float32)
    targets3 = jax.random.randint(k2, (N3,), 0, C3, dtype=jnp.int32)
    loss3 = focal_loss(logits3, targets3, alpha=1, gamma=2)
    jax.block_until_ready(loss3)
    ref3 = _ref_focal(logits3, targets3, 1.0, 2.0)
    assert jnp.allclose(loss3, ref3, rtol=1e-5, atol=1e-5), (loss3, ref3)

    print("KERNEL_OK")
</pallas_src>

<mosaic_0001>
module attributes {stable_mosaic.version = 11 : i64} {
  func.func @_focal_partial_kernel(%arg0: i32, %arg1: memref<8x16xf32, #tpu.memory_space<vmem>>, %arg2: memref<8x1xi32, #tpu.memory_space<vmem>>, %arg3: memref<1x1x128xf32, #tpu.memory_space<vmem>>) attributes {dimension_semantics = [#tpu.dimension_semantics<parallel>], iteration_bounds = array<i64: 1>, scalar_prefetch = 0 : i64, scratch_operands = 0 : i64, tpu.core_type = #tpu.core_type<tc>, window_params = [{transform_indices = @transform_0, window_bounds = array<i64: 8, 16>}, {transform_indices = @transform_1, window_bounds = array<i64: 8, 1>}, {transform_indices = @transform_2, window_bounds = array<i64: 1, 1, 128>}]} {
    %c0 = arith.constant 0 : index
    %c0_0 = arith.constant 0 : index
    %0 = vector.load %arg1[%c0, %c0_0] : memref<8x16xf32, #tpu.memory_space<vmem>>, vector<8x16xf32>
    %c0_1 = arith.constant 0 : index
    %c0_2 = arith.constant 0 : index
    %1 = vector.load %arg2[%c0_1, %c0_2] : memref<8x1xi32, #tpu.memory_space<vmem>>, vector<8x1xi32>
    %cst = arith.constant dense<0xFF800000> : vector<8xf32>
    %2 = vector.multi_reduction <maximumf>, %0, %cst [1] : vector<8x16xf32> to vector<8xf32>
    %3 = vector.shape_cast %2 : vector<8xf32> to vector<8x1xf32>
    %4 = vector.broadcast %3 : vector<8x1xf32> to vector<8x16xf32>
    %5 = arith.subf %0, %4 : vector<8x16xf32>
    %6 = math.exp %5 : vector<8x16xf32>
    %cst_3 = arith.constant dense<0.000000e+00> : vector<8xf32>
    %7 = vector.multi_reduction <add>, %6, %cst_3 [1] : vector<8x16xf32> to vector<8xf32>
    %8 = vector.shape_cast %7 : vector<8xf32> to vector<8x1xf32>
    %9 = math.log %8 : vector<8x1xf32>
    %10 = tpu.iota {dimensions = array<i32: 1>} : vector<8x16xi32>
    %11 = vector.broadcast %1 : vector<8x1xi32> to vector<8x16xi32>
    %12 = arith.cmpi eq, %10, %11 : vector<8x16xi32>
    %cst_4 = arith.constant 0.000000e+00 : f32
    %13 = vector.broadcast %cst_4 : f32 to vector<8x16xf32>
    %14 = arith.select %12, %5, %13 : vector<8x16xi1>, vector<8x16xf32>
    %cst_5 = arith.constant dense<0.000000e+00> : vector<8xf32>
    %15 = vector.multi_reduction <add>, %14, %cst_5 [1] : vector<8x16xf32> to vector<8xf32>
    %16 = vector.shape_cast %15 : vector<8xf32> to vector<8x1xf32>
    %17 = arith.subf %9, %16 : vector<8x1xf32>
    %18 = vector.shape_cast %17 : vector<8x1xf32> to vector<1x8x1xf32>
    %cst_6 = arith.constant dense<0.000000e+00> : vector<1xf32>
    %19 = vector.multi_reduction <add>, %18, %cst_6 [1, 2] : vector<1x8x1xf32> to vector<1xf32>
    %20 = vector.shape_cast %19 : vector<1xf32> to vector<1x1x1xf32>
    %21 = vector.extract %20[0, 0, 0] : f32 from vector<1x1x1xf32>
    %22 = vector.broadcast %21 : f32 to vector<1x1x128xf32>
    %c0_7 = arith.constant 0 : index
    %c0_8 = arith.constant 0 : index
    %c0_9 = arith.constant 0 : index
    %23 = vector.load %arg3[%c0_7, %c0_8, %c0_9] : memref<1x1x128xf32, #tpu.memory_space<vmem>>, vector<1x1x128xf32>
    tpu.vector_store %arg3[%c0_7, %c0_8, %c0_9], %22 {strides = array<i32>} : memref<1x1x128xf32, #tpu.memory_space<vmem>>, vector<1x1x128xf32>,
    return
  }
  func.func @transform_0(%arg0: i32) -> (i32, i32) {
    %c0_i32 = arith.constant 0 : i32
    %c0_i32_0 = arith.constant 0 : i32
    return %arg0, %c0_i32 : i32, i32
  }
  func.func @transform_1(%arg0: i32) -> (i32, i32) {
    %c0_i32 = arith.constant 0 : i32
    %c0_i32_0 = arith.constant 0 : i32
    return %arg0, %c0_i32 : i32, i32
  }
  func.func @transform_2(%arg0: i32) -> (i32, i32, i32) {
    %c0_i32 = arith.constant 0 : i32
    %c0_i32_0 = arith.constant 0 : i32
    %c0_i32_1 = arith.constant 0 : i32
    return %arg0, %c0_i32, %c0_i32_0 : i32, i32, i32
  }
}

</mosaic_0001>

<llo_original>
// kernel: tpu_custom_call.1
$region0: #{tpu_custom_call.1}
  #allocation0 [shape = 'u32[]', space=smem, size = 0x4, offset = 0x4, fixed_abs, tag = 'smem constant byte address 0x4 - core index']
  #allocation1 [shape = 'u32[144,128]{1,0:T(1,128)}', space=vmem, size = 0x12000, scoped, tag = 'internal scratch']
  %s0 = inlined_call_operand.vmem [shape: f32[8,16], index: 0, kind: input, shape index: {}]
  %s1 = inlined_call_operand.vmem [shape: s32[8,1], index: 1, kind: input, shape index: {}]
  %s2 = inlined_call_operand.hbm [shape: f32[1,1,128], index: 2, kind: output, shape index: {}]
  %s3 = sld [smem:[#allocation0]]
  $region18: #{tpu_custom_call.1} parent=0
    _
  %s5 = ssub.s32 1, %s3
  %s6 = scalar_select 0, %s5, %s3
  $region1: #{tpu_custom_call.1} parent=0
    #allocation2 [shape = 'u8[512]{0}', space=vmem, size = 0x400, scoped, tag = 'output window, operand 0, single buffered']
    #allocation3 [shape = 's32[1]{0}', space=sflag, size = 0x4, scoped, tag = 'scoped memory for tpu_custom_call.1']
    %7 = vsyncpa [#allocation3], 0
    // Predicated region
    $region2: #{tpu_custom_call.1} parent=1 // pred_check
      _
    $region3: #{tpu_custom_call.1} parent=1 // pred_check_branch
      %9 = sbr.rel (0) target = $region5
    $region4: #{tpu_custom_call.1} parent=1 // pred_region
      _
    $region5: #{tpu_custom_call.1} parent=1 // pred_fallthru
      _
    // Predicated region
    $region6: #{tpu_custom_call.1} parent=1 // pred_check
      _
    $region7: #{tpu_custom_call.1} parent=1 // pred_check_branch
      %11 = sbr.rel (0) target = $region9
    $region8: #{tpu_custom_call.1} parent=1 // pred_region
      _
    $region9: #{tpu_custom_call.1} parent=1 // pred_fallthru
      _
    %v12 = vld [vmem:[%s0] sm:$0xff]
    %v13 = vld [vmem:[%s1] sm:$0xff]
    %vm14 = vcmask 130048
    %v15 = vsel %vm14, %v12, -inf
    %16 = vmax.xlane.f32.xlu0 %v15
    %v17 = vpop.xlane.xlu0 %16
    %v18 = vsub.f32 %v12, %v17
    %v19 = vmul.f32 %v18, 1.442695
    %v20 = vpow.pop %v19
    %v21 = vsel %vm14, %v20, 0.0
    %22 = vadd.xlane.f32.xlu0 %v21
    %v23 = vpop.xlane.xlu0 %22
    %v24 = vlog2.pop %v23
    %v25 = vmul.f32 %v24, 0.6931472
    %v26 = vlaneseq
    %v27 = vand.u32 %v26, 127
    %28 = vset.pattern.permute.xlu0 0
    %29 = vperm.xlu0 %28, %v13
    %v30 = vpop.permute.xlu0 %29
    %vm31 = vcmp.eq.s32.totalorder %v27, %v30
    %v32 = vsel %vm31, %v18, 0.0
    %v33 = vsel %vm14, %v32, 0.0
    %34 = vadd.xlane.f32.xlu0 %v33
    %v35 = vpop.xlane.xlu0 %34
    %v36 = vsub.f32 %v25, %v35
    %vm37 = vcmask 7168
    %v38 = vsel %vm37, %v36, 0.0
    %39 = vadd.xlane.f32.xlu0 %v38
    %v40 = vpop.xlane.xlu0 %39
    %v41 = vrot.slane %v40, 4
    %v42 = vadd.f32 %v40, %v41
    %v43 = vrot.slane %v42, 2
    %v44 = vadd.f32 %v42, %v43
    %v45 = vrot.slane %v44, 1
    %v46 = vadd.f32 %v44, %v45
    %s47 = vtos %v46
    %v48 = vstv %s47
    %49 = vst [vmem:[#allocation2] sm:$0x1] %v48
    // Predicated region
    $region10: #{tpu_custom_call.1} parent=1 // pred_check
      _
    $region11: #{tpu_custom_call.1} parent=1 // pred_check_branch
      %51 = sbr.rel (0) target = $region13
    $region12: #{tpu_custom_call.1} parent=1 // pred_region
      %s53 = ssub.s32 16, 16
      %54 = vsyncadd [#allocation3], %s53
      %s56 = sshll.u32 [#allocation2], 4
      %s57 = int_to_ptr.vmem [resolvable:$true] %s56
      %59 = dma.vmem_to_hbm [thread:$0]  %s57, 16, %s2, [#allocation3]
    $region13: #{tpu_custom_call.1} parent=1 // pred_fallthru
      _
    // Predicated region
    $region14: #{tpu_custom_call.1} parent=1 // pred_check
      _
    $region15: #{tpu_custom_call.1} parent=1 // pred_check_branch
      %61 = sbr.rel (0) target = $region17
    $region16: #{tpu_custom_call.1} parent=1 // pred_region
      %62 = dma.done [#allocation3], 16
    $region17: #{tpu_custom_call.1} parent=1 // pred_fallthru
      _
    %63 = vsyncpa [#allocation3], 1

</llo_original>
